<compile_context>
chip_gen: v7x
topology: tpu7x:2x2x1
jax: 0.10.0
libtpu: 0.0.40
codegen_flags: <defaults>
</compile_context>

<pallas_src>
import math

import jax
import jax.numpy as jnp
from jax.experimental import pallas as pl
from jax.experimental.pallas import tpu as pltpu

F32 = jnp.float32
BF16 = jnp.bfloat16


def _layernorm(x, gamma, beta, eps=1e-5):
    # PyTorch LayerNorm: biased variance, eps inside the sqrt.
    mean = jnp.mean(x, axis=-1, keepdims=True)
    var = jnp.mean((x - mean) ** 2, axis=-1, keepdims=True)
    return (x - mean) * jax.lax.rsqrt(var + eps) * gamma + beta


# ----------------------------- kernel 1: QKV projection ------------------------------

def _qkv_proj_kernel(x_ref, wq_ref, bq_ref, wk_ref, bk_ref, wv_ref, bv_ref,
                     q_ref, k_ref, v_ref):
    """One x row tile -> scaled Q, K, V stored head-major (1, H, TM, hd) in bf16."""
    H = q_ref.shape[1]
    hd = q_ref.shape[3]
    xt = x_ref[0].astype(BF16)                                              # (TM, E)
    q = jnp.dot(xt, wq_ref[...], preferred_element_type=F32) + bq_ref[0]    # scale pre-folded
    k = jnp.dot(xt, wk_ref[...], preferred_element_type=F32) + bk_ref[0]
    v = jnp.dot(xt, wv_ref[...], preferred_element_type=F32) + bv_ref[0]
    # One-time head split (layout only, amortized over all attention steps).
    # TODO(synk): swap for a single pltpu.einshape relayout once hd-lane stores show up
    #             in the store-slot profile; this runs once per row so it is off the hot path.
    for h in range(H):
        q_ref[0, h] = q[:, h * hd:(h + 1) * hd].astype(BF16)
        k_ref[0, h] = k[:, h * hd:(h + 1) * hd].astype(BF16)
        v_ref[0, h] = v[:, h * hd:(h + 1) * hd].astype(BF16)


# ------------------- kernel 2: flash attention + fused out-projection ----------------

def _flash_attn_kernel(q_ref, k_ref, v_ref, wo_ref, bo_ref, o_ref,
                       m_sc, l_sc, acc_sc):
    ki = pl.program_id(2)
    n_kv = pl.num_programs(2)
    H = q_ref.shape[1]

    @pl.when(ki == 0)
    def _():
        m_sc[...] = jnp.full_like(m_sc, -jnp.inf)
        l_sc[...] = jnp.zeros_like(l_sc)
        acc_sc[...] = jnp.zeros_like(acc_sc)

    qh = q_ref[0]                                              # (H, TQ, hd) bf16 (resident)
    kh = k_ref[0]                                              # (H, TK, hd) bf16
    vh = v_ref[0]                                              # (H, TK, hd) bf16

    s = jnp.einsum("hqd,hkd->hqk", qh, kh,
                   preferred_element_type=F32)                 # (H, TQ, TK) f32
    m_prev = m_sc[...]
    m_new = jnp.maximum(m_prev, jnp.max(s, axis=-1, keepdims=True))
    alpha = jnp.exp(m_prev - m_new)
    p = jnp.exp(s - m_new)                                     # f32 softmax math
    l_sc[...] = alpha * l_sc[...] + jnp.sum(p, axis=-1, keepdims=True)
    acc_sc[...] = alpha * acc_sc[...] + jnp.einsum(
        "hqk,hkd->hqd", p.astype(BF16), vh, preferred_element_type=F32)
    m_sc[...] = m_new

    @pl.when(ki == n_kv - 1)
    def _():
        # approx reciprocal (EUP) -> ~1e-3 relative error in 1/l; fine for inference.
        inv_l = pl.reciprocal(l_sc[...], approx=True)
        o = acc_sc[...] * inv_l                                # (H, TQ, hd) f32
        # Head-merge fused into the out projection:
        #   attn = einsum('hqd,hde->qe', o, Wo.reshape(H, hd, E)) + bo
        # unrolled over h (sum of per-head dots) -> no merge scratch, no in-kernel reshape.
        acc = jnp.dot(o[0].astype(BF16), wo_ref[0], preferred_element_type=F32)
        for h in range(1, H):
            acc = acc + jnp.dot(o[h].astype(BF16), wo_ref[h],
                                preferred_element_type=F32)
        o_ref[0] = (acc + bo_ref[0]).astype(o_ref.dtype)


# ----------------- kernel 3: residual + LN1 + FFN (chunked) + residual + LN2 ----------

def _ffn_ln_kernel(x_ref, attn_ref, g1_ref, be1_ref, w1_ref, b1_ref,
                   w2_ref, b2_ref, g2_ref, be2_ref, o_ref, x1_sc, acc_sc):
    hc = pl.program_id(2)
    n_hc = pl.num_programs(2)

    @pl.when(hc == 0)
    def _():
        x1_sc[...] = _layernorm(x_ref[0] + attn_ref[0], g1_ref[0], be1_ref[0])
        acc_sc[...] = jnp.zeros_like(acc_sc)

    # One 4E-hidden chunk per grid step: w1/w2 are streamed, never fully VMEM-resident.
    h = jnp.dot(x1_sc[...].astype(BF16), w1_ref[...],
                preferred_element_type=F32) + b1_ref[0]
    h = jnp.maximum(h, 0.0)                                    # ReLU is elementwise -> chunkable
    acc_sc[...] += jnp.dot(h.astype(BF16), w2_ref[...], preferred_element_type=F32)

    @pl.when(hc == n_hc - 1)
    def _():
        ff = acc_sc[...] + b2_ref[0]
        o_ref[0] = _layernorm(x1_sc[...] + ff, g2_ref[0], be2_ref[0]).astype(o_ref.dtype)


# --------------------------------- tiling / VMEM helpers ------------------------------

def _pick_seq_tile(s, target=256):
    """Largest tile <= target dividing s, preferring multiples of 128 (lane-dense scores)."""
    if s % 128 == 0:
        for t in range(min(target, s), 0, -128):
            if s % t == 0:
                return t
    if s <= 512:
        return s                              # full extent is always a legal block
    for t in range(min(target, s), 7, -8):
        if s % t == 0:
            return t
    return s


def _pick_hidden_tile(fh, target=512):
    if fh <= target:
        return fh
    for t in range(target, 127, -128):
        if fh % t == 0:
            return t
    return fh


def _vmem_limit_bytes():
    """Per-generation scoped-VMEM budget: ~85% of physical (128 MiB v5e/v6e, 64 MiB v7x)."""
    try:
        cap = int(pltpu.get_tpu_info().vmem_capacity_bytes)
        return max(32 * 2 ** 20, int(cap * 0.85))
    except Exception:
        return None                           # sizing fallback only; keep compiler default


def _cparams(dimension_semantics, vmem_limit):
    if vmem_limit is None:
        return pltpu.CompilerParams(dimension_semantics=dimension_semantics)
    return pltpu.CompilerParams(dimension_semantics=dimension_semantics,
                                vmem_limit_bytes=vmem_limit)


# --------------------------------------- wrapper --------------------------------------

def transformer_block(x, params, n_embd, n_head):
    B, S, E = x.shape
    assert E == n_embd and E % n_head == 0
    H = n_head
    hd = E // H
    scale = 1.0 / math.sqrt(hd)

    # ---- weight prep (layout plumbing only) ----
    w_in = params["in_proj_weight"]                      # (3E, E): rows [Q; K; V]
    b_in = params["in_proj_bias"]                        # (3E,)
    # Fold the 1/sqrt(head_dim) attention scale into the Q projection weight AND bias.
    w_q = (w_in[0:E].T * scale).astype(BF16)             # (E, E)
    w_k = w_in[E:2 * E].T.astype(BF16)
    w_v = w_in[2 * E:3 * E].T.astype(BF16)
    b_q = (b_in[0:E] * scale)[None, :].astype(F32)       # (1, E)
    b_k = b_in[E:2 * E][None, :].astype(F32)
    b_v = b_in[2 * E:3 * E][None, :].astype(F32)
    # Out-projection pre-reshaped head-major so head-merge fuses into the projection.
    w_o = params["out_proj_weight"].T.astype(BF16).reshape(H, hd, E)
    b_o = params["out_proj_bias"][None, :].astype(F32)
    g1 = params["ln1_weight"][None, :].astype(F32)
    be1 = params["ln1_bias"][None, :].astype(F32)
    w1 = params["ff1_weight"].T.astype(BF16)             # (E, 4E)
    bf1 = params["ff1_bias"][None, :].astype(F32)        # (1, 4E)
    w2 = params["ff2_weight"].T.astype(BF16)             # (4E, E)
    bf2 = params["ff2_bias"][None, :].astype(F32)
    g2 = params["ln2_weight"][None, :].astype(F32)
    be2 = params["ln2_bias"][None, :].astype(F32)

    TM = _pick_seq_tile(S)            # row tile for projection / FFN kernels
    TQ = _pick_seq_tile(S)            # attention q tile
    TK = _pick_seq_tile(S)            # attention kv tile (lane dim of the scores)
    FH = 4 * E
    TH = _pick_hidden_tile(FH)        # FFN hidden chunk
    vmem_limit = _vmem_limit_bytes()

    # ---- 1) QKV projection, hoisted out of the attention grid (run once per row) ----
    q, k, v = pl.pallas_call(
        _qkv_proj_kernel,
        out_shape=tuple(jax.ShapeDtypeStruct((B, H, S, hd), BF16) for _ in range(3)),
        grid=(B, S // TM),
        in_specs=[
            pl.BlockSpec((1, TM, E), lambda b, m: (b, m, 0)),
            pl.BlockSpec((E, E), lambda b, m: (0, 0)),
            pl.BlockSpec((1, E), lambda b, m: (0, 0)),
            pl.BlockSpec((E, E), lambda b, m: (0, 0)),
            pl.BlockSpec((1, E), lambda b, m: (0, 0)),
            pl.BlockSpec((E, E), lambda b, m: (0, 0)),
            pl.BlockSpec((1, E), lambda b, m: (0, 0)),
        ],
        out_specs=tuple(pl.BlockSpec((1, H, TM, hd), lambda b, m: (b, 0, m, 0))
                        for _ in range(3)),
        compiler_params=_cparams(("parallel", "parallel"), vmem_limit),
    )(x, w_q, b_q, w_k, b_k, w_v, b_v)

    # ---- 2) flash attention over head-major bf16 tiles + fused out-projection ----
    attn = pl.pallas_call(
        _flash_attn_kernel,
        out_shape=jax.ShapeDtypeStruct((B, S, E), F32),
        grid=(B, S // TQ, S // TK),
        in_specs=[
            pl.BlockSpec((1, H, TQ, hd), lambda b, qi, ki: (b, 0, qi, 0)),
            pl.BlockSpec((1, H, TK, hd), lambda b, qi, ki: (b, 0, ki, 0)),
            pl.BlockSpec((1, H, TK, hd), lambda b, qi, ki: (b, 0, ki, 0)),
            pl.BlockSpec((H, hd, E), lambda b, qi, ki: (0, 0, 0)),
            pl.BlockSpec((1, E), lambda b, qi, ki: (0, 0)),
        ],
        out_specs=pl.BlockSpec((1, TQ, E), lambda b, qi, ki: (b, qi, 0)),
        scratch_shapes=[
            pltpu.VMEM((H, TQ, 1), F32),      # running max
            pltpu.VMEM((H, TQ, 1), F32),      # running denominator
            pltpu.VMEM((H, TQ, hd), F32),     # output accumulator
        ],
        compiler_params=_cparams(("parallel", "parallel", "arbitrary"), vmem_limit),
    )(q, k, v, w_o, b_o)

    # ---- 3) residual + LN1 + FFN (hidden dim streamed in chunks) + residual + LN2 ----
    out = pl.pallas_call(
        _ffn_ln_kernel,
        out_shape=jax.ShapeDtypeStruct((B, S, E), x.dtype),
        grid=(B, S // TM, FH // TH),
        in_specs=[
            pl.BlockSpec((1, TM, E), lambda b, m, hc: (b, m, 0)),   # x (residual stream)
            pl.BlockSpec((1, TM, E), lambda b, m, hc: (b, m, 0)),   # attention output
            pl.BlockSpec((1, E), lambda b, m, hc: (0, 0)),          # ln1 gamma
            pl.BlockSpec((1, E), lambda b, m, hc: (0, 0)),          # ln1 beta
            pl.BlockSpec((E, TH), lambda b, m, hc: (0, hc)),        # W1 hidden chunk
            pl.BlockSpec((1, TH), lambda b, m, hc: (0, hc)),        # b1 hidden chunk
            pl.BlockSpec((TH, E), lambda b, m, hc: (hc, 0)),        # W2 hidden chunk
            pl.BlockSpec((1, E), lambda b, m, hc: (0, 0)),          # b2
            pl.BlockSpec((1, E), lambda b, m, hc: (0, 0)),          # ln2 gamma
            pl.BlockSpec((1, E), lambda b, m, hc: (0, 0)),          # ln2 beta
        ],
        out_specs=pl.BlockSpec((1, TM, E), lambda b, m, hc: (b, m, 0)),
        scratch_shapes=[
            pltpu.VMEM((TM, E), F32),        # x1 = LN1(x + attn), resident across chunks
            pltpu.VMEM((TM, E), F32),        # FFN second-matmul accumulator
        ],
        compiler_params=_cparams(("parallel", "parallel", "arbitrary"), vmem_limit),
    )(x, attn, g1, be1, w1, bf1, w2, bf2, g2, be2)
    return out


# --------------------------------- reference & driver ---------------------------------

def ref_forward(x, params, n_embd, n_head):
    """Pure-JAX f32 reference mirroring the torch semantics (correctness check)."""
    E, H = n_embd, n_head
    hd = E // H
    qkv = x @ params["in_proj_weight"].T + params["in_proj_bias"]
    q, k, v = jnp.split(qkv, 3, axis=-1)
    B, S, _ = x.shape

    def split_heads(t):  # (B, S, E) -> (B, H, S, hd)
        return t.reshape(B, S, H, hd).transpose(0, 2, 1, 3)

    qh, kh, vh = split_heads(q), split_heads(k), split_heads(v)
    s = jnp.einsum("bhqd,bhkd->bhqk", qh, kh) / math.sqrt(hd)
    p = jax.nn.softmax(s, axis=-1)
    a = jnp.einsum("bhqk,bhkd->bhqd", p, vh).transpose(0, 2, 1, 3).reshape(B, S, E)
    attn = a @ params["out_proj_weight"].T + params["out_proj_bias"]

    x1 = _layernorm(x + attn, params["ln1_weight"], params["ln1_bias"])
    h1 = jnp.maximum(x1 @ params["ff1_weight"].T + params["ff1_bias"], 0.0)
    ff = h1 @ params["ff2_weight"].T + params["ff2_bias"]
    return _layernorm(x1 + ff, params["ln2_weight"], params["ln2_bias"])


def init_params(key, n_embd):
    E = n_embd
    keys = jax.random.split(key, 8)
    scale = 0.02
    return {
        "in_proj_weight": scale * jax.random.normal(keys[0], (3 * E, E), F32),
        "in_proj_bias": scale * jax.random.normal(keys[1], (3 * E,), F32),
        "out_proj_weight": scale * jax.random.normal(keys[2], (E, E), F32),
        "out_proj_bias": scale * jax.random.normal(keys[3], (E,), F32),
        "ln1_weight": jnp.ones((E,), F32),
        "ln1_bias": jnp.zeros((E,), F32),
        "ff1_weight": scale * jax.random.normal(keys[4], (4 * E, E), F32),
        "ff1_bias": scale * jax.random.normal(keys[5], (4 * E,), F32),
        "ff2_weight": scale * jax.random.normal(keys[6], (E, 4 * E), F32),
        "ff2_bias": scale * jax.random.normal(keys[7], (E,), F32),
        "ln2_weight": jnp.ones((E,), F32),
        "ln2_bias": jnp.zeros((E,), F32),
    }


if __name__ == "__main__":
    B, S, n_embd, n_head = 2, 8, 32, 4
    key = jax.random.PRNGKey(0)
    kx, kp = jax.random.split(key)
    x = jax.random.normal(kx, (B, S, n_embd), F32)
    params = init_params(kp, n_embd)

    out = jax.block_until_ready(transformer_block(x, params, n_embd, n_head))
    ref = jax.block_until_ready(ref_forward(x, params, n_embd, n_head))

    assert out.shape == (B, S, n_embd)
    max_err = float(jnp.max(jnp.abs(out - ref)))
    # bf16 matmul operands (f32 accumulation, f32 LN/residual) -> slightly loose tolerance.
    assert jnp.allclose(out, ref, rtol=2e-2, atol=2e-2), \
        f"mismatch vs reference (max abs err {max_err})"

    print("KERNEL_OK")
</pallas_src>

<mosaic_0001>
module attributes {stable_mosaic.version = 11 : i64} {
  func.func @_qkv_proj_kernel(%arg0: i32, %arg1: i32, %arg2: memref<1x8x32xf32, #tpu.memory_space<vmem>>, %arg3: memref<32x32xbf16, #tpu.memory_space<vmem>>, %arg4: memref<1x32xf32, #tpu.memory_space<vmem>>, %arg5: memref<32x32xbf16, #tpu.memory_space<vmem>>, %arg6: memref<1x32xf32, #tpu.memory_space<vmem>>, %arg7: memref<32x32xbf16, #tpu.memory_space<vmem>>, %arg8: memref<1x32xf32, #tpu.memory_space<vmem>>, %arg9: memref<1x4x8x8xbf16, #tpu.memory_space<vmem>>, %arg10: memref<1x4x8x8xbf16, #tpu.memory_space<vmem>>, %arg11: memref<1x4x8x8xbf16, #tpu.memory_space<vmem>>) attributes {dimension_semantics = [#tpu.dimension_semantics<parallel>, #tpu.dimension_semantics<parallel>], iteration_bounds = array<i64: 2, 1>, scalar_prefetch = 0 : i64, scratch_operands = 0 : i64, tpu.core_type = #tpu.core_type<tc>, window_params = [{transform_indices = @transform_0, window_bounds = array<i64: 1, 8, 32>}, {pipeline_mode = #tpu.pipeline_mode<synchronous>, transform_indices = @transform_1, window_bounds = array<i64: 32, 32>}, {pipeline_mode = #tpu.pipeline_mode<synchronous>, transform_indices = @transform_2, window_bounds = array<i64: 1, 32>}, {pipeline_mode = #tpu.pipeline_mode<synchronous>, transform_indices = @transform_3, window_bounds = array<i64: 32, 32>}, {pipeline_mode = #tpu.pipeline_mode<synchronous>, transform_indices = @transform_4, window_bounds = array<i64: 1, 32>}, {pipeline_mode = #tpu.pipeline_mode<synchronous>, transform_indices = @transform_5, window_bounds = array<i64: 32, 32>}, {pipeline_mode = #tpu.pipeline_mode<synchronous>, transform_indices = @transform_6, window_bounds = array<i64: 1, 32>}, {transform_indices = @transform_7, window_bounds = array<i64: 1, 4, 8, 8>}, {transform_indices = @transform_8, window_bounds = array<i64: 1, 4, 8, 8>}, {transform_indices = @transform_9, window_bounds = array<i64: 1, 4, 8, 8>}]} {
    %c0 = arith.constant 0 : index
    %c0_0 = arith.constant 0 : index
    %c0_1 = arith.constant 0 : index
    %0 = vector.load %arg2[%c0, %c0_0, %c0_1] : memref<1x8x32xf32, #tpu.memory_space<vmem>>, vector<1x8x32xf32>
    %1 = vector.shape_cast %0 : vector<1x8x32xf32> to vector<8x32xf32>
    %2 = arith.truncf %1 : vector<8x32xf32> to vector<8x32xbf16>
    %c0_2 = arith.constant 0 : index
    %c0_3 = arith.constant 0 : index
    %3 = vector.load %arg3[%c0_2, %c0_3] : memref<32x32xbf16, #tpu.memory_space<vmem>>, vector<32x32xbf16>
    %cst = arith.constant dense<0.000000e+00> : vector<8x32xf32>
    %4 = tpu.matmul %2, %3, %cst {dimension_numbers = #tpu.dot_dimension_numbers<[1], [0], [0], [1], [0, 0, 1, 1], [], []>} : vector<8x32xbf16>, vector<32x32xbf16>, vector<8x32xf32> -> vector<8x32xf32>
    %c0_4 = arith.constant 0 : index
    %c0_5 = arith.constant 0 : index
    %5 = vector.load %arg4[%c0_4, %c0_5] : memref<1x32xf32, #tpu.memory_space<vmem>>, vector<1x32xf32>
    %6 = vector.shape_cast %5 : vector<1x32xf32> to vector<32xf32>
    %7 = vector.shape_cast %6 : vector<32xf32> to vector<1x32xf32>
    %8 = vector.broadcast %7 : vector<1x32xf32> to vector<8x32xf32>
    %9 = arith.addf %4, %8 : vector<8x32xf32>
    %c0_6 = arith.constant 0 : index
    %c0_7 = arith.constant 0 : index
    %10 = vector.load %arg5[%c0_6, %c0_7] : memref<32x32xbf16, #tpu.memory_space<vmem>>, vector<32x32xbf16>
    %cst_8 = arith.constant dense<0.000000e+00> : vector<8x32xf32>
    %11 = tpu.matmul %2, %10, %cst_8 {dimension_numbers = #tpu.dot_dimension_numbers<[1], [0], [0], [1], [0, 0, 1, 1], [], []>} : vector<8x32xbf16>, vector<32x32xbf16>, vector<8x32xf32> -> vector<8x32xf32>
    %c0_9 = arith.constant 0 : index
    %c0_10 = arith.constant 0 : index
    %12 = vector.load %arg6[%c0_9, %c0_10] : memref<1x32xf32, #tpu.memory_space<vmem>>, vector<1x32xf32>
    %13 = vector.shape_cast %12 : vector<1x32xf32> to vector<32xf32>
    %14 = vector.shape_cast %13 : vector<32xf32> to vector<1x32xf32>
    %15 = vector.broadcast %14 : vector<1x32xf32> to vector<8x32xf32>
    %16 = arith.addf %11, %15 : vector<8x32xf32>
    %c0_11 = arith.constant 0 : index
    %c0_12 = arith.constant 0 : index
    %17 = vector.load %arg7[%c0_11, %c0_12] : memref<32x32xbf16, #tpu.memory_space<vmem>>, vector<32x32xbf16>
    %cst_13 = arith.constant dense<0.000000e+00> : vector<8x32xf32>
    %18 = tpu.matmul %2, %17, %cst_13 {dimension_numbers = #tpu.dot_dimension_numbers<[1], [0], [0], [1], [0, 0, 1, 1], [], []>} : vector<8x32xbf16>, vector<32x32xbf16>, vector<8x32xf32> -> vector<8x32xf32>
    %c0_14 = arith.constant 0 : index
    %c0_15 = arith.constant 0 : index
    %19 = vector.load %arg8[%c0_14, %c0_15] : memref<1x32xf32, #tpu.memory_space<vmem>>, vector<1x32xf32>
    %20 = vector.shape_cast %19 : vector<1x32xf32> to vector<32xf32>
    %21 = vector.shape_cast %20 : vector<32xf32> to vector<1x32xf32>
    %22 = vector.broadcast %21 : vector<1x32xf32> to vector<8x32xf32>
    %23 = arith.addf %18, %22 : vector<8x32xf32>
    %24 = vector.extract_strided_slice %9 {offsets = [0, 0], sizes = [8, 8], strides = [1, 1]} : vector<8x32xf32> to vector<8x8xf32>
    %25 = arith.truncf %24 : vector<8x8xf32> to vector<8x8xbf16>
    %c0_16 = arith.constant 0 : index
    %c0_17 = arith.constant 0 : index
    %c0_18 = arith.constant 0 : index
    %c0_19 = arith.constant 0 : index
    %26 = vector.load %arg9[%c0_16, %c0_17, %c0_18, %c0_19] : memref<1x4x8x8xbf16, #tpu.memory_space<vmem>>, vector<1x1x8x8xbf16>
    %27 = vector.shape_cast %26 : vector<1x1x8x8xbf16> to vector<8x8xbf16>
    %28 = vector.shape_cast %25 : vector<8x8xbf16> to vector<1x1x8x8xbf16>
    tpu.vector_store %arg9[%c0_16, %c0_17, %c0_18, %c0_19], %28 {strides = array<i32>} : memref<1x4x8x8xbf16, #tpu.memory_space<vmem>>, vector<1x1x8x8xbf16>,
    %29 = vector.extract_strided_slice %16 {offsets = [0, 0], sizes = [8, 8], strides = [1, 1]} : vector<8x32xf32> to vector<8x8xf32>
    %30 = arith.truncf %29 : vector<8x8xf32> to vector<8x8xbf16>
    %c0_20 = arith.constant 0 : index
    %c0_21 = arith.constant 0 : index
    %c0_22 = arith.constant 0 : index
    %c0_23 = arith.constant 0 : index
    %31 = vector.load %arg10[%c0_20, %c0_21, %c0_22, %c0_23] : memref<1x4x8x8xbf16, #tpu.memory_space<vmem>>, vector<1x1x8x8xbf16>
    %32 = vector.shape_cast %31 : vector<1x1x8x8xbf16> to vector<8x8xbf16>
    %33 = vector.shape_cast %30 : vector<8x8xbf16> to vector<1x1x8x8xbf16>
    tpu.vector_store %arg10[%c0_20, %c0_21, %c0_22, %c0_23], %33 {strides = array<i32>} : memref<1x4x8x8xbf16, #tpu.memory_space<vmem>>, vector<1x1x8x8xbf16>,
    %34 = vector.extract_strided_slice %23 {offsets = [0, 0], sizes = [8, 8], strides = [1, 1]} : vector<8x32xf32> to vector<8x8xf32>
    %35 = arith.truncf %34 : vector<8x8xf32> to vector<8x8xbf16>
    %c0_24 = arith.constant 0 : index
    %c0_25 = arith.constant 0 : index
    %c0_26 = arith.constant 0 : index
    %c0_27 = arith.constant 0 : index
    %36 = vector.load %arg11[%c0_24, %c0_25, %c0_26, %c0_27] : memref<1x4x8x8xbf16, #tpu.memory_space<vmem>>, vector<1x1x8x8xbf16>
    %37 = vector.shape_cast %36 : vector<1x1x8x8xbf16> to vector<8x8xbf16>
    %38 = vector.shape_cast %35 : vector<8x8xbf16> to vector<1x1x8x8xbf16>
    tpu.vector_store %arg11[%c0_24, %c0_25, %c0_26, %c0_27], %38 {strides = array<i32>} : memref<1x4x8x8xbf16, #tpu.memory_space<vmem>>, vector<1x1x8x8xbf16>,
    %39 = vector.extract_strided_slice %9 {offsets = [0, 8], sizes = [8, 8], strides = [1, 1]} : vector<8x32xf32> to vector<8x8xf32>
    %40 = arith.truncf %39 : vector<8x8xf32> to vector<8x8xbf16>
    %c0_28 = arith.constant 0 : index
    %c1 = arith.constant 1 : index
    %c0_29 = arith.constant 0 : index
    %c0_30 = arith.constant 0 : index
    %41 = vector.load %arg9[%c0_28, %c1, %c0_29, %c0_30] : memref<1x4x8x8xbf16, #tpu.memory_space<vmem>>, vector<1x1x8x8xbf16>
    %42 = vector.shape_cast %41 : vector<1x1x8x8xbf16> to vector<8x8xbf16>
    %43 = vector.shape_cast %40 : vector<8x8xbf16> to vector<1x1x8x8xbf16>
    tpu.vector_store %arg9[%c0_28, %c1, %c0_29, %c0_30], %43 {strides = array<i32>} : memref<1x4x8x8xbf16, #tpu.memory_space<vmem>>, vector<1x1x8x8xbf16>,
    %44 = vector.extract_strided_slice %16 {offsets = [0, 8], sizes = [8, 8], strides = [1, 1]} : vector<8x32xf32> to vector<8x8xf32>
    %45 = arith.truncf %44 : vector<8x8xf32> to vector<8x8xbf16>
    %c0_31 = arith.constant 0 : index
    %c1_32 = arith.constant 1 : index
    %c0_33 = arith.constant 0 : index
    %c0_34 = arith.constant 0 : index
    %46 = vector.load %arg10[%c0_31, %c1_32, %c0_33, %c0_34] : memref<1x4x8x8xbf16, #tpu.memory_space<vmem>>, vector<1x1x8x8xbf16>
    %47 = vector.shape_cast %46 : vector<1x1x8x8xbf16> to vector<8x8xbf16>
    %48 = vector.shape_cast %45 : vector<8x8xbf16> to vector<1x1x8x8xbf16>
    tpu.vector_store %arg10[%c0_31, %c1_32, %c0_33, %c0_34], %48 {strides = array<i32>} : memref<1x4x8x8xbf16, #tpu.memory_space<vmem>>, vector<1x1x8x8xbf16>,
    %49 = vector.extract_strided_slice %23 {offsets = [0, 8], sizes = [8, 8], strides = [1, 1]} : vector<8x32xf32> to vector<8x8xf32>
    %50 = arith.truncf %49 : vector<8x8xf32> to vector<8x8xbf16>
    %c0_35 = arith.constant 0 : index
    %c1_36 = arith.constant 1 : index
    %c0_37 = arith.constant 0 : index
    %c0_38 = arith.constant 0 : index
    %51 = vector.load %arg11[%c0_35, %c1_36, %c0_37, %c0_38] : memref<1x4x8x8xbf16, #tpu.memory_space<vmem>>, vector<1x1x8x8xbf16>
    %52 = vector.shape_cast %51 : vector<1x1x8x8xbf16> to vector<8x8xbf16>
    %53 = vector.shape_cast %50 : vector<8x8xbf16> to vector<1x1x8x8xbf16>
    tpu.vector_store %arg11[%c0_35, %c1_36, %c0_37, %c0_38], %53 {strides = array<i32>} : memref<1x4x8x8xbf16, #tpu.memory_space<vmem>>, vector<1x1x8x8xbf16>,
    %54 = vector.extract_strided_slice %9 {offsets = [0, 16], sizes = [8, 8], strides = [1, 1]} : vector<8x32xf32> to vector<8x8xf32>
    %55 = arith.truncf %54 : vector<8x8xf32> to vector<8x8xbf16>
    %c0_39 = arith.constant 0 : index
    %c2 = arith.constant 2 : index
    %c0_40 = arith.constant 0 : index
    %c0_41 = arith.constant 0 : index
    %56 = vector.load %arg9[%c0_39, %c2, %c0_40, %c0_41] : memref<1x4x8x8xbf16, #tpu.memory_space<vmem>>, vector<1x1x8x8xbf16>
    %57 = vector.shape_cast %56 : vector<1x1x8x8xbf16> to vector<8x8xbf16>
    %58 = vector.shape_cast %55 : vector<8x8xbf16> to vector<1x1x8x8xbf16>
    tpu.vector_store %arg9[%c0_39, %c2, %c0_40, %c0_41], %58 {strides = array<i32>} : memref<1x4x8x8xbf16, #tpu.memory_space<vmem>>, vector<1x1x8x8xbf16>,
    %59 = vector.extract_strided_slice %16 {offsets = [0, 16], sizes = [8, 8], strides = [1, 1]} : vector<8x32xf32> to vector<8x8xf32>
    %60 = arith.truncf %59 : vector<8x8xf32> to vector<8x8xbf16>
    %c0_42 = arith.constant 0 : index
    %c2_43 = arith.constant 2 : index
    %c0_44 = arith.constant 0 : index
    %c0_45 = arith.constant 0 : index
    %61 = vector.load %arg10[%c0_42, %c2_43, %c0_44, %c0_45] : memref<1x4x8x8xbf16, #tpu.memory_space<vmem>>, vector<1x1x8x8xbf16>
    %62 = vector.shape_cast %61 : vector<1x1x8x8xbf16> to vector<8x8xbf16>
    %63 = vector.shape_cast %60 : vector<8x8xbf16> to vector<1x1x8x8xbf16>
    tpu.vector_store %arg10[%c0_42, %c2_43, %c0_44, %c0_45], %63 {strides = array<i32>} : memref<1x4x8x8xbf16, #tpu.memory_space<vmem>>, vector<1x1x8x8xbf16>,
    %64 = vector.extract_strided_slice %23 {offsets = [0, 16], sizes = [8, 8], strides = [1, 1]} : vector<8x32xf32> to vector<8x8xf32>
    %65 = arith.truncf %64 : vector<8x8xf32> to vector<8x8xbf16>
    %c0_46 = arith.constant 0 : index
    %c2_47 = arith.constant 2 : index
    %c0_48 = arith.constant 0 : index
    %c0_49 = arith.constant 0 : index
    %66 = vector.load %arg11[%c0_46, %c2_47, %c0_48, %c0_49] : memref<1x4x8x8xbf16, #tpu.memory_space<vmem>>, vector<1x1x8x8xbf16>
    %67 = vector.shape_cast %66 : vector<1x1x8x8xbf16> to vector<8x8xbf16>
    %68 = vector.shape_cast %65 : vector<8x8xbf16> to vector<1x1x8x8xbf16>
    tpu.vector_store %arg11[%c0_46, %c2_47, %c0_48, %c0_49], %68 {strides = array<i32>} : memref<1x4x8x8xbf16, #tpu.memory_space<vmem>>, vector<1x1x8x8xbf16>,
    %69 = vector.extract_strided_slice %9 {offsets = [0, 24], sizes = [8, 8], strides = [1, 1]} : vector<8x32xf32> to vector<8x8xf32>
    %70 = arith.truncf %69 : vector<8x8xf32> to vector<8x8xbf16>
    %c0_50 = arith.constant 0 : index
    %c3 = arith.constant 3 : index
    %c0_51 = arith.constant 0 : index
    %c0_52 = arith.constant 0 : index
    %71 = vector.load %arg9[%c0_50, %c3, %c0_51, %c0_52] : memref<1x4x8x8xbf16, #tpu.memory_space<vmem>>, vector<1x1x8x8xbf16>
    %72 = vector.shape_cast %71 : vector<1x1x8x8xbf16> to vector<8x8xbf16>
    %73 = vector.shape_cast %70 : vector<8x8xbf16> to vector<1x1x8x8xbf16>
    tpu.vector_store %arg9[%c0_50, %c3, %c0_51, %c0_52], %73 {strides = array<i32>} : memref<1x4x8x8xbf16, #tpu.memory_space<vmem>>, vector<1x1x8x8xbf16>,
    %74 = vector.extract_strided_slice %16 {offsets = [0, 24], sizes = [8, 8], strides = [1, 1]} : vector<8x32xf32> to vector<8x8xf32>
    %75 = arith.truncf %74 : vector<8x8xf32> to vector<8x8xbf16>
    %c0_53 = arith.constant 0 : index
    %c3_54 = arith.constant 3 : index
    %c0_55 = arith.constant 0 : index
    %c0_56 = arith.constant 0 : index
    %76 = vector.load %arg10[%c0_53, %c3_54, %c0_55, %c0_56] : memref<1x4x8x8xbf16, #tpu.memory_space<vmem>>, vector<1x1x8x8xbf16>
    %77 = vector.shape_cast %76 : vector<1x1x8x8xbf16> to vector<8x8xbf16>
    %78 = vector.shape_cast %75 : vector<8x8xbf16> to vector<1x1x8x8xbf16>
    tpu.vector_store %arg10[%c0_53, %c3_54, %c0_55, %c0_56], %78 {strides = array<i32>} : memref<1x4x8x8xbf16, #tpu.memory_space<vmem>>, vector<1x1x8x8xbf16>,
    %79 = vector.extract_strided_slice %23 {offsets = [0, 24], sizes = [8, 8], strides = [1, 1]} : vector<8x32xf32> to vector<8x8xf32>
    %80 = arith.truncf %79 : vector<8x8xf32> to vector<8x8xbf16>
    %c0_57 = arith.constant 0 : index
    %c3_58 = arith.constant 3 : index
    %c0_59 = arith.constant 0 : index
    %c0_60 = arith.constant 0 : index
    %81 = vector.load %arg11[%c0_57, %c3_58, %c0_59, %c0_60] : memref<1x4x8x8xbf16, #tpu.memory_space<vmem>>, vector<1x1x8x8xbf16>
    %82 = vector.shape_cast %81 : vector<1x1x8x8xbf16> to vector<8x8xbf16>
    %83 = vector.shape_cast %80 : vector<8x8xbf16> to vector<1x1x8x8xbf16>
    tpu.vector_store %arg11[%c0_57, %c3_58, %c0_59, %c0_60], %83 {strides = array<i32>} : memref<1x4x8x8xbf16, #tpu.memory_space<vmem>>, vector<1x1x8x8xbf16>,
    return
  }
  func.func @transform_0(%arg0: i32, %arg1: i32) -> (i32, i32, i32) {
    %c0_i32 = arith.constant 0 : i32
    %c0_i32_0 = arith.constant 0 : i32
    return %arg0, %arg1, %c0_i32 : i32, i32, i32
  }
  func.func @transform_1(%arg0: i32, %arg1: i32) -> (i32, i32) {
    %c0_i32 = arith.constant 0 : i32
    %c0_i32_0 = arith.constant 0 : i32
    %c0_i32_1 = arith.constant 0 : i32
    return %c0_i32, %c0_i32_0 : i32, i32
  }
  func.func @transform_2(%arg0: i32, %arg1: i32) -> (i32, i32) {
    %c0_i32 = arith.constant 0 : i32
    %c0_i32_0 = arith.constant 0 : i32
    %c0_i32_1 = arith.constant 0 : i32
    return %c0_i32, %c0_i32_0 : i32, i32
  }
  func.func @transform_3(%arg0: i32, %arg1: i32) -> (i32, i32) {
    %c0_i32 = arith.constant 0 : i32
    %c0_i32_0 = arith.constant 0 : i32
    %c0_i32_1 = arith.constant 0 : i32
    return %c0_i32, %c0_i32_0 : i32, i32
  }
  func.func @transform_4(%arg0: i32, %arg1: i32) -> (i32, i32) {
    %c0_i32 = arith.constant 0 : i32
    %c0_i32_0 = arith.constant 0 : i32
    %c0_i32_1 = arith.constant 0 : i32
    return %c0_i32, %c0_i32_0 : i32, i32
  }
  func.func @transform_5(%arg0: i32, %arg1: i32) -> (i32, i32) {
    %c0_i32 = arith.constant 0 : i32
    %c0_i32_0 = arith.constant 0 : i32
    %c0_i32_1 = arith.constant 0 : i32
    return %c0_i32, %c0_i32_0 : i32, i32
  }
  func.func @transform_6(%arg0: i32, %arg1: i32) -> (i32, i32) {
    %c0_i32 = arith.constant 0 : i32
    %c0_i32_0 = arith.constant 0 : i32
    %c0_i32_1 = arith.constant 0 : i32
    return %c0_i32, %c0_i32_0 : i32, i32
  }
  func.func @transform_7(%arg0: i32, %arg1: i32) -> (i32, i32, i32, i32) {
    %c0_i32 = arith.constant 0 : i32
    %c0_i32_0 = arith.constant 0 : i32
    %c0_i32_1 = arith.constant 0 : i32
    return %arg0, %c0_i32, %arg1, %c0_i32_0 : i32, i32, i32, i32
  }
  func.func @transform_8(%arg0: i32, %arg1: i32) -> (i32, i32, i32, i32) {
    %c0_i32 = arith.constant 0 : i32
    %c0_i32_0 = arith.constant 0 : i32
    %c0_i32_1 = arith.constant 0 : i32
    return %arg0, %c0_i32, %arg1, %c0_i32_0 : i32, i32, i32, i32
  }
  func.func @transform_9(%arg0: i32, %arg1: i32) -> (i32, i32, i32, i32) {
    %c0_i32 = arith.constant 0 : i32
    %c0_i32_0 = arith.constant 0 : i32
    %c0_i32_1 = arith.constant 0 : i32
    return %arg0, %c0_i32, %arg1, %c0_i32_0 : i32, i32, i32, i32
  }
}

</mosaic_0001>

<llo_original>
// kernel: tpu_custom_call.1
$region0: #{tpu_custom_call.1}
  #allocation0 [shape = 'u32[]', space=smem, size = 0x4, offset = 0x4, fixed_abs, tag = 'smem constant byte address 0x4 - core index']
  #allocation1 [shape = 'u32[144,128]{1,0:T(1,128)}', space=vmem, size = 0x12000, scoped, tag = 'internal scratch']
  %s0 = inlined_call_operand.hbm [shape: f32[2,8,32], index: 0, kind: input, shape index: {}]
  %s1 = inlined_call_operand.hbm [shape: bf16[32,32], index: 1, kind: input, shape index: {}]
  %s2 = inlined_call_operand.vmem [shape: f32[1,32], index: 2, kind: input, shape index: {}]
  %s3 = inlined_call_operand.hbm [shape: bf16[32,32], index: 3, kind: input, shape index: {}]
  %s4 = inlined_call_operand.vmem [shape: f32[1,32], index: 4, kind: input, shape index: {}]
  %s5 = inlined_call_operand.vmem [shape: bf16[32,32], index: 5, kind: input, shape index: {}]
  %s6 = inlined_call_operand.vmem [shape: f32[1,32], index: 6, kind: input, shape index: {}]
  %s7 = inlined_call_operand.hbm [shape: bf16[2,4,8,8], index: 7, kind: output, shape index: {0}]
  %s8 = inlined_call_operand.hbm [shape: bf16[2,4,8,8], index: 8, kind: output, shape index: {1}]
  %s9 = inlined_call_operand.hbm [shape: bf16[2,4,8,8], index: 9, kind: output, shape index: {2}]
  %10 = xla_tuple %s7, %s8, %s9
  %s11 = sld [smem:[#allocation0]]
  $region89: #{tpu_custom_call.1} parent=0
    _
  %s13 = ssub.s32 1, %s11
  %s14 = scalar_select 0, %s13, %s11
  $region1: #{tpu_custom_call.1} parent=0
    #allocation2 [shape = 'u8[8192]{0}', space=vmem, size = 0x2000, scoped, tag = 'input window, operand 0']
    #allocation3 [shape = 's32[2]{0}', space=sflag, size = 0x8, scoped, tag = 'scoped memory for tpu_custom_call.1']
    #allocation4 [shape = 's32[2]{0}', space=sflag, size = 0x8, scoped, tag = 'scoped memory for tpu_custom_call.1']
    #allocation5 [shape = 'u8[8192]{0}', space=vmem, size = 0x2000, scoped, tag = 'input window, operand 1, single buffered']
    #allocation6 [shape = 's32[1]{0}', space=sflag, size = 0x4, scoped, tag = 'scoped memory for tpu_custom_call.1']
    #allocation7 [shape = 'u8[8192]{0}', space=vmem, size = 0x2000, scoped, tag = 'input window, operand 3, single buffered']
    #allocation8 [shape = 'u8[16384]{0}', space=vmem, size = 0x4000, scoped, tag = 'output window, operand 0']
    #allocation9 [shape = 'u8[16384]{0}', space=vmem, size = 0x4000, scoped, tag = 'output window, operand 1']
    #allocation10 [shape = 's32[2]{0}', space=sflag, size = 0x8, scoped, tag = 'scoped memory for tpu_custom_call.1']
    #allocation11 [shape = 'u8[16384]{0}', space=vmem, size = 0x4000, scoped, tag = 'output window, operand 2']
    %15 = vsyncpa [#allocation3], 0
    %s16 = scalar_lea.sflag [#allocation3], 1
    %17 = vsyncpa %s16, 0
    %18 = vsyncpa [#allocation6], 0
    %19 = vsyncpa [#allocation4], 0
    %s20 = scalar_lea.sflag [#allocation4], 1
    %21 = vsyncpa %s20, 0
    %22 = vsyncpa [#allocation10], 0
    %s23 = scalar_lea.sflag [#allocation10], 1
    %24 = vsyncpa %s23, 0
    loop: start=0, step=1, limit=4
    $region2: #{tpu_custom_call.1} parent=1 // loop_pre_header
      _
    $region3: #{tpu_custom_call.1} parent=1 // loop_header
      %s26 = sphi 0, %s30
      %p27 = scmp.ge.s32.totalorder %s26, 4
      %s33 = sphi 0, %s45
      %s34 = sphi 0, %s41
      %s35 = sphi 0, %s33
      %s36 = sphi 0, %s34
      %s37 = sphi 0, %s35
      %s38 = sphi 0, %s36
      %s50 = sphi 0, %s52
      %s53 = sphi 0, %s50
      %s54 = sphi 0, %s53
      %s70 = sphi 0, %s54
      %s74 = sphi 0, %s74
      %s76 = sphi 0, %s74
      %s77 = sphi 0, %s76
      %s91 = sphi 0, %s77
      %s95 = sphi 0, %s95
      %s97 = sphi 0, %s95
      %s98 = sphi 0, %s97
      %s112 = sphi 0, %s98
      %s116 = sphi 0, %s116
      %s118 = sphi 0, %s116
      %s119 = sphi 0, %s118
      %s133 = sphi 0, %s119
      %s137 = sphi 0, %s137
      %s139 = sphi 0, %s137
      %s140 = sphi 0, %s139
      %s154 = sphi 0, %s140
      %s158 = sphi 0, %s158
      %s160 = sphi 0, %s158
      %s161 = sphi 0, %s160
      %s175 = sphi 0, %s161
      %s179 = sphi 0, %s179
      %s181 = sphi 0, %s179
      %s182 = sphi 0, %s181
      %s196 = sphi 0, %s182
      %s204 = sphi 0, %s206
      %s207 = sphi 0, %s204
      %s208 = sphi 0, %s207
      %s224 = sphi 0, %s208
      %s232 = sphi 0, %s234
      %s235 = sphi 0, %s232
      %s236 = sphi 0, %s235
      %s252 = sphi 0, %s236
      %s260 = sphi 0, %s262
      %s263 = sphi 0, %s260
      %s264 = sphi 0, %s263
      %s280 = sphi 0, %s264
    $region4: #{tpu_custom_call.1} parent=1 // loop_header_branch
      %29 = sbr.rel (%p27) target = $region8
    $region5: #{tpu_custom_call.1} parent=1 // loop_body
      %s31 = ssub.s32 %s26, 1
      %s32 = ssub.s32 %s26, 2
      %s39 = sadd.s32 1, %s34
      %p40 = scmp.ge.s32.totalorder %s39, 1
      %s41 = scalar_select %p40, 0, %s39
      %s42 = sadd.s32 1, %s33
      %s43 = scalar_select %p40, %s42, %s33
      %p44 = scmp.ge.s32.totalorder %s43, 2
      %s45 = scalar_select %p44, 0, %s43
      %s46 = ssub.s32 %s33, %s45
      %s47 = ssub.s32 %s34, %s41
      %s48 = sor.u32 %s46, %s47
      %p49 = scmp.eq.s32.totalorder %s48, 0
      %s51 = sadd.s32 %s50, 1
      %s52 = scalar_select %p49, %s50, %s51
      %p55 = pneg %p49
      %p56 = scmp.eq.s32.totalorder %s26, 1
      %p57 = por %p55, %p56
      %p58 = scmp.ne.s32.totalorder %s50, %s53
      %p59 = scmp.eq.s32.totalorder %s26, 0
      %p60 = por %p58, %p59
      %p61 = scmp.ne.s32.totalorder %s50, %s53
      %p62 = scmp.eq.s32.totalorder %s31, 1
      %p63 = por %p61, %p62
      %p64 = scmp.ne.s32.totalorder %s53, %s54
      %p65 = scmp.eq.s32.totalorder %s31, 0
      %p66 = por %p64, %p65
      %p67 = scmp.ne.s32.totalorder %s53, %s54
      %p68 = scmp.eq.s32.totalorder %s32, 1
      %p69 = por %p67, %p68
      %p71 = scmp.ne.s32.totalorder %s54, %s70
      %p72 = scmp.eq.s32.totalorder %s32, 0
      %p73 = por %p71, %p72
      %s75 = sadd.s32 %s74, 1
      %p78 = scmp.eq.s32.totalorder %s26, 1
      %p79 = scmp.ne.s32.totalorder %s74, %s76
      %p80 = scmp.eq.s32.totalorder %s26, 0
      %p81 = por %p79, %p80
      %p82 = scmp.ne.s32.totalorder %s74, %s76
      %p83 = scmp.eq.s32.totalorder %s31, 1
      %p84 = por %p82, %p83
      %p85 = scmp.ne.s32.totalorder %s76, %s77
      %p86 = scmp.eq.s32.totalorder %s31, 0
      %p87 = por %p85, %p86
      %p88 = scmp.ne.s32.totalorder %s76, %s77
      %p89 = scmp.eq.s32.totalorder %s32, 1
      %p90 = por %p88, %p89
      %p92 = scmp.ne.s32.totalorder %s77, %s91
      %p93 = scmp.eq.s32.totalorder %s32, 0
      %p94 = por %p92, %p93
      %s96 = sadd.s32 %s95, 1
      %p99 = scmp.eq.s32.totalorder %s26, 1
      %p100 = scmp.ne.s32.totalorder %s95, %s97
      %p101 = scmp.eq.s32.totalorder %s26, 0
      %p102 = por %p100, %p101
      %p103 = scmp.ne.s32.totalorder %s95, %s97
      %p104 = scmp.eq.s32.totalorder %s31, 1
      %p105 = por %p103, %p104
      %p106 = scmp.ne.s32.totalorder %s97, %s98
      %p107 = scmp.eq.s32.totalorder %s31, 0
      %p108 = por %p106, %p107
      %p109 = scmp.ne.s32.totalorder %s97, %s98
      %p110 = scmp.eq.s32.totalorder %s32, 1
      %p111 = por %p109, %p110
      %p113 = scmp.ne.s32.totalorder %s98, %s112
      %p114 = scmp.eq.s32.totalorder %s32, 0
      %p115 = por %p113, %p114
      %s117 = sadd.s32 %s116, 1
      %p120 = scmp.eq.s32.totalorder %s26, 1
      %p121 = scmp.ne.s32.totalorder %s116, %s118
      %p122 = scmp.eq.s32.totalorder %s26, 0
      %p123 = por %p121, %p122
      %p124 = scmp.ne.s32.totalorder %s116, %s118
      %p125 = scmp.eq.s32.totalorder %s31, 1
      %p126 = por %p124, %p125
      %p127 = scmp.ne.s32.totalorder %s118, %s119
      %p128 = scmp.eq.s32.totalorder %s31, 0
      %p129 = por %p127, %p128
      %p130 = scmp.ne.s32.totalorder %s118, %s119
      %p131 = scmp.eq.s32.totalorder %s32, 1
      %p132 = por %p130, %p131
      %p134 = scmp.ne.s32.totalorder %s119, %s133
      %p135 = scmp.eq.s32.totalorder %s32, 0
      %p136 = por %p134, %p135
      %s138 = sadd.s32 %s137, 1
      %p141 = scmp.eq.s32.totalorder %s26, 1
      %p142 = scmp.ne.s32.totalorder %s137, %s139
      %p143 = scmp.eq.s32.totalorder %s26, 0
      %p144 = por %p142, %p143
      %p145 = scmp.ne.s32.totalorder %s137, %s139
      %p146 = scmp.eq.s32.totalorder %s31, 1
      %p147 = por %p145, %p146
      %p148 = scmp.ne.s32.totalorder %s139, %s140
      %p149 = scmp.eq.s32.totalorder %s31, 0
      %p150 = por %p148, %p149
      %p151 = scmp.ne.s32.totalorder %s139, %s140
      %p152 = scmp.eq.s32.totalorder %s32, 1
      %p153 = por %p151, %p152
      %p155 = scmp.ne.s32.totalorder %s140, %s154
      %p156 = scmp.eq.s32.totalorder %s32, 0
      %p157 = por %p155, %p156
      %s159 = sadd.s32 %s158, 1
      %p162 = scmp.eq.s32.totalorder %s26, 1
      %p163 = scmp.ne.s32.totalorder %s158, %s160
      %p164 = scmp.eq.s32.totalorder %s26, 0
      %p165 = por %p163, %p164
      %p166 = scmp.ne.s32.totalorder %s158, %s160
      %p167 = scmp.eq.s32.totalorder %s31, 1
      %p168 = por %p166, %p167
      %p169 = scmp.ne.s32.totalorder %s160, %s161
      %p170 = scmp.eq.s32.totalorder %s31, 0
      %p171 = por %p169, %p170
      %p172 = scmp.ne.s32.totalorder %s160, %s161
      %p173 = scmp.eq.s32.totalorder %s32, 1
      %p174 = por %p172, %p173
      %p176 = scmp.ne.s32.totalorder %s161, %s175
      %p177 = scmp.eq.s32.totalorder %s32, 0
      %p178 = por %p176, %p177
      %s180 = sadd.s32 %s179, 1
      %p183 = scmp.eq.s32.totalorder %s26, 1
      %p184 = scmp.ne.s32.totalorder %s179, %s181
      %p185 = scmp.eq.s32.totalorder %s26, 0
      %p186 = por %p184, %p185
      %p187 = scmp.ne.s32.totalorder %s179, %s181
      %p188 = scmp.eq.s32.totalorder %s31, 1
      %p189 = por %p187, %p188
      %p190 = scmp.ne.s32.totalorder %s181, %s182
      %p191 = scmp.eq.s32.totalorder %s31, 0
      %p192 = por %p190, %p191
      %p193 = scmp.ne.s32.totalorder %s181, %s182
      %p194 = scmp.eq.s32.totalorder %s32, 1
      %p195 = por %p193, %p194
      %p197 = scmp.ne.s32.totalorder %s182, %s196
      %p198 = scmp.eq.s32.totalorder %s32, 0
      %p199 = por %p197, %p198
      %s200 = ssub.s32 %s33, %s45
      %s201 = ssub.s32 %s34, %s41
      %s202 = sor.u32 %s200, %s201
      %p203 = scmp.eq.s32.totalorder %s202, 0
      %s205 = sadd.s32 %s204, 1
      %s206 = scalar_select %p203, %s204, %s205
      %p209 = pneg %p203
      %p210 = scmp.eq.s32.totalorder %s26, 1
      %p211 = por %p209, %p210
      %p212 = scmp.ne.s32.totalorder %s204, %s207
      %p213 = scmp.eq.s32.totalorder %s26, 0
      %p214 = por %p212, %p213
      %p215 = scmp.ne.s32.totalorder %s204, %s207
      %p216 = scmp.eq.s32.totalorder %s31, 1
      %p217 = por %p215, %p216
      %p218 = scmp.ne.s32.totalorder %s207, %s208
      %p219 = scmp.eq.s32.totalorder %s31, 0
      %p220 = por %p218, %p219
      %p221 = scmp.ne.s32.totalorder %s207, %s208
      %p222 = scmp.eq.s32.totalorder %s32, 1
      %p223 = por %p221, %p222
      %p225 = scmp.ne.s32.totalorder %s208, %s224
      %p226 = scmp.eq.s32.totalorder %s32, 0
      %p227 = por %p225, %p226
      %s228 = ssub.s32 %s33, %s45
      %s229 = ssub.s32 %s34, %s41
      %s230 = sor.u32 %s228, %s229
      %p231 = scmp.eq.s32.totalorder %s230, 0
      %s233 = sadd.s32 %s232, 1
      %s234 = scalar_select %p231, %s232, %s233
      %p237 = pneg %p231
      %p238 = scmp.eq.s32.totalorder %s26, 1
      %p239 = por %p237, %p238
      %p240 = scmp.ne.s32.totalorder %s232, %s235
      %p241 = scmp.eq.s32.totalorder %s26, 0
      %p242 = por %p240, %p241
      %p243 = scmp.ne.s32.totalorder %s232, %s235
      %p244 = scmp.eq.s32.totalorder %s31, 1
      %p245 = por %p243, %p244
      %p246 = scmp.ne.s32.totalorder %s235, %s236
      %p247 = scmp.eq.s32.totalorder %s31, 0
      %p248 = por %p246, %p247
      %p249 = scmp.ne.s32.totalorder %s235, %s236
      %p250 = scmp.eq.s32.totalorder %s32, 1
      %p251 = por %p249, %p250
      %p253 = scmp.ne.s32.totalorder %s236, %s252
      %p254 = scmp.eq.s32.totalorder %s32, 0
      %p255 = por %p253, %p254
      %s256 = ssub.s32 %s33, %s45
      %s257 = ssub.s32 %s34, %s41
      %s258 = sor.u32 %s256, %s257
      %p259 = scmp.eq.s32.totalorder %s258, 0
      %s261 = sadd.s32 %s260, 1
      %s262 = scalar_select %p259, %s260, %s261
      %p265 = pneg %p259
      %p266 = scmp.eq.s32.totalorder %s26, 1
      %p267 = por %p265, %p266
      %p268 = scmp.ne.s32.totalorder %s260, %s263
      %p269 = scmp.eq.s32.totalorder %s26, 0
      %p270 = por %p268, %p269
      %p271 = scmp.ne.s32.totalorder %s260, %s263
      %p272 = scmp.eq.s32.totalorder %s31, 1
      %p273 = por %p271, %p272
      %p274 = scmp.ne.s32.totalorder %s263, %s264
      %p275 = scmp.eq.s32.totalorder %s31, 0
      %p276 = por %p274, %p275
      %p277 = scmp.ne.s32.totalorder %s263, %s264
      %p278 = scmp.eq.s32.totalorder %s32, 1
      %p279 = por %p277, %p278
      %p281 = scmp.ne.s32.totalorder %s264, %s280
      %p282 = scmp.eq.s32.totalorder %s32, 0
      %p283 = por %p281, %p282
      %p284 = scmp.le.s32.totalorder 1, %s26
      %p285 = scmp.lt.s32.totalorder %s26, 3
      %p286 = pnand %p284, %p285
      %p287 = pneg %p286
      // Predicated region
      $region9: #{tpu_custom_call.1} parent=5 // pred_check
        _
      $region10: #{tpu_custom_call.1} parent=5 // pred_check_branch
        %289 = sbr.rel (%p286) target = $region12
      $region11: #{tpu_custom_call.1} parent=5 // pred_region
        %s290 = ssub.s32 %s26, 1
        // Predicated region
        $region13: #{tpu_custom_call.1} parent=11 // pred_check
          %p291 = pneg %p87
        $region14: #{tpu_custom_call.1} parent=11 // pred_check_branch
          %293 = sbr.rel (%p291) target = $region16
        $region15: #{tpu_custom_call.1} parent=11 // pred_region
          %s295 = ssub.s32 256, 256
          %296 = vsyncadd [#allocation6], %s295
          %s297 = sshll.u32 [#allocation5], 4
          %s298 = int_to_ptr.vmem [resolvable:$true] %s297
          %303 = dma.hbm_to_vmem [thread:$0]  %s1, 256, %s298, [#allocation6], 64, 64, 4
        $region16: #{tpu_custom_call.1} parent=11 // pred_fallthru
          _
        // Predicated region
        $region17: #{tpu_custom_call.1} parent=11 // pred_check
          %p304 = pneg %p108
        $region18: #{tpu_custom_call.1} parent=11 // pred_check_branch
          %306 = sbr.rel (%p304) target = $region20
        $region19: #{tpu_custom_call.1} parent=11 // pred_region
          _
        $region20: #{tpu_custom_call.1} parent=11 // pred_fallthru
          _
        // Predicated region
        $region21: #{tpu_custom_call.1} parent=11 // pred_check
          %p307 = pneg %p129
        $region22: #{tpu_custom_call.1} parent=11 // pred_check_branch
          %309 = sbr.rel (%p307) target = $region24
        $region23: #{tpu_custom_call.1} parent=11 // pred_region
          %s311 = ssub.s32 256, 256
          %312 = vsyncadd [#allocation6], %s311
          %s313 = sshll.u32 [#allocation7], 4
          %s314 = int_to_ptr.vmem [resolvable:$true] %s313
          %319 = dma.hbm_to_vmem [thread:$0]  %s3, 256, %s314, [#allocation6], 64, 64, 4
        $region24: #{tpu_custom_call.1} parent=11 // pred_fallthru
          _
        // Predicated region
        $region25: #{tpu_custom_call.1} parent=11 // pred_check
          %p320 = pneg %p150
        $region26: #{tpu_custom_call.1} parent=11 // pred_check_branch
          %322 = sbr.rel (%p320) target = $region28
        $region27: #{tpu_custom_call.1} parent=11 // pred_region
          _
        $region28: #{tpu_custom_call.1} parent=11 // pred_fallthru
          _
        // Predicated region
        $region29: #{tpu_custom_call.1} parent=11 // pred_check
          %p323 = pneg %p171
        $region30: #{tpu_custom_call.1} parent=11 // pred_check_branch
          %325 = sbr.rel (%p323) target = $region32
        $region31: #{tpu_custom_call.1} parent=11 // pred_region
          _
        $region32: #{tpu_custom_call.1} parent=11 // pred_fallthru
          _
        // Predicated region
        $region33: #{tpu_custom_call.1} parent=11 // pred_check
          %p326 = pneg %p192
        $region34: #{tpu_custom_call.1} parent=11 // pred_check_branch
          %328 = sbr.rel (%p326) target = $region36
        $region35: #{tpu_custom_call.1} parent=11 // pred_region
          _
        $region36: #{tpu_custom_call.1} parent=11 // pred_fallthru
          _
      $region12: #{tpu_custom_call.1} parent=5 // pred_fallthru
        _
      %p329 = scmp.lt.s32.totalorder %s26, 2
      // Predicated region
      $region37: #{tpu_custom_call.1} parent=5 // pred_check
        %p330 = pneg %p329
      $region38: #{tpu_custom_call.1} parent=5 // pred_check_branch
        %332 = sbr.rel (%p330) target = $region40
      $region39: #{tpu_custom_call.1} parent=5 // pred_region
        // Predicated region
        $region41: #{tpu_custom_call.1} parent=39 // pred_check
          %p333 = pneg %p60
        $region42: #{tpu_custom_call.1} parent=39 // pred_check_branch
          %335 = sbr.rel (%p333) target = $region44
        $region43: #{tpu_custom_call.1} parent=39 // pred_region
          %s336 = sand.u32 %s50, 1
          %s337 = scalar_lea.sflag [#allocation3], %s336
          %s338 = sand.u32 %s50, 1
          %s339 = smul.addr %s338, 8
          %s340 = scalar_lea.vmem [#allocation2], %s339
          %s342 = ssub.s32 128, 128
          %343 = vsyncadd %s337, %s342
          %s344 = sadd.s32 %s34, %s33
          %s345 = smul.addr %s344, 128
          %s346 = scalar_lea.hbm %s0, %s345
          %s348 = sshll.u32 %s340, 4
          %s349 = int_to_ptr.vmem [resolvable:$true] %s348
          %351 = dma.hbm_to_vmem [thread:$0]  %s346, 128, %s349, %s337
        $region44: #{tpu_custom_call.1} parent=39 // pred_fallthru
          _
      $region40: #{tpu_custom_call.1} parent=5 // pred_fallthru
        _
      %p352 = scmp.le.s32.totalorder 1, %s26
      %p353 = scmp.lt.s32.totalorder %s26, 3
      %p354 = pnand %p352, %p353
      %p355 = pneg %p354
      // Predicated region
      $region45: #{tpu_custom_call.1} parent=5 // pred_check
        _
      $region46: #{tpu_custom_call.1} parent=5 // pred_check_branch
        %357 = sbr.rel (%p354) target = $region48
      $region47: #{tpu_custom_call.1} parent=5 // pred_region
        %s358 = ssub.s32 %s26, 1
        %s359 = sand.u32 %s53, 1
        %s360 = scalar_lea.sflag [#allocation3], %s359
        %s361 = sand.u32 %s53, 1
        %s362 = smul.addr %s361, 8
        %s363 = scalar_lea.vmem [#allocation2], %s362
        // Predicated region
        $region49: #{tpu_custom_call.1} parent=47 // pred_check
          %p364 = pneg %p66
        $region50: #{tpu_custom_call.1} parent=47 // pred_check_branch
          %366 = sbr.rel (%p364) target = $region52
        $region51: #{tpu_custom_call.1} parent=47 // pred_region
          %367 = dma.done %s360, 128
        $region52: #{tpu_custom_call.1} parent=47 // pred_fallthru
          _
        // Predicated region
        $region53: #{tpu_custom_call.1} parent=47 // pred_check
          %p368 = pneg %p87
        $region54: #{tpu_custom_call.1} parent=47 // pred_check_branch
          %370 = sbr.rel (%p368) target = $region56
        $region55: #{tpu_custom_call.1} parent=47 // pred_region
          %371 = dma.done [#allocation6], 256
        $region56: #{tpu_custom_call.1} parent=47 // pred_fallthru
          _
        // Predicated region
        $region57: #{tpu_custom_call.1} parent=47 // pred_check
          %p372 = pneg %p129
        $region58: #{tpu_custom_call.1} parent=47 // pred_check_branch
          %374 = sbr.rel (%p372) target = $region60
        $region59: #{tpu_custom_call.1} parent=47 // pred_region
          %375 = dma.done [#allocation6], 256
        $region60: #{tpu_custom_call.1} parent=47 // pred_fallthru
          _
        %s376 = sand.u32 %s53, 1
        %s377 = scalar_lea.sflag [#allocation3], %s376
        %s378 = sand.u32 %s53, 1
        %s379 = smul.addr %s378, 8
        %s380 = scalar_lea.vmem [#allocation2], %s379
        %p381 = pneg %p66
        %p382 = pneg %p63
        %p383 = pneg %p87
        %p384 = pneg %p84
        %p385 = pneg %p108
        %p386 = pneg %p105
        %p387 = pneg %p129
        %p388 = pneg %p126
        %p389 = pneg %p150
        %p390 = pneg %p147
        %p391 = pneg %p171
        %p392 = pneg %p168
        %p393 = pneg %p192
        %p394 = pneg %p189
        %p395 = pneg %p220
        %p396 = pneg %p217
        %s397 = sand.u32 %s207, 1
        %s398 = scalar_lea.sflag [#allocation4], %s397
        %s399 = sand.u32 %s207, 1
        %s400 = smul.addr %s399, 16
        %s401 = scalar_lea.vmem [#allocation8], %s400
        %p402 = pneg %p248
        %p403 = pneg %p245
        %s404 = sand.u32 %s31, 1
        %s405 = scalar_lea.sflag [#allocation10], %s404
        %s406 = sand.u32 %s235, 1
        %s407 = smul.addr %s406, 16
        %s408 = scalar_lea.vmem [#allocation9], %s407
        %p409 = pneg %p276
        %p410 = pneg %p273
        %s411 = sand.u32 %s31, 1
        %s412 = scalar_lea.sflag [#allocation10], %s411
        %s413 = sand.u32 %s263, 1
        %s414 = smul.addr %s413, 16
        %s415 = scalar_lea.vmem [#allocation11], %s414
        %v417 = vld [vmem:[%s363] sm:$0xff]
        %v418 = vpack.c.bf16 %v417, %v417
        %v419 = vld [vmem:[#allocation5] sm:$0xf]
        %v420 = vld [vmem:[#allocation5 + $0x4] sm:$0xf]
        %v421 = vld [vmem:[#allocation5 + $0x8] sm:$0xf]
        %v422 = vld [vmem:[#allocation5 + $0xc] sm:$0xf]
        %v423 = vld [vmem:[%s2] sm:$0x1]
        %v425 = vlaneseq
        %v426 = vshrl.u32 %v425, 7
        %v427 = vsub.s32 0, %v426
        %v428 = vrot.slane %v423, %v427
        %v434 = vunpack.c.l.b16 %v419
        %v435 = vunpack.c.l.b16 %v420
        %v436 = vunpack.c.l.b16 %v421
        %v437 = vunpack.c.l.b16 %v422
        %v438 = vpack.c.b16 %v435, %v434
        %v439 = vpack.c.b16 %v437, %v436
        %vm442 = vcmask 261120
        %v444 = vsel %vm442, %v418, 0
        %446 = vmatprep.subr.bf16.mxu0 0
        %447 = vmatpush1.bf16.msra.mxu0 %v438
        %448 = vmatprep.subr.bf16.mxu0 0
        %449 = vmatpush1.bf16.msra.mxu0 %v439
        %450 = vmatprep.subr.bf16.mxu0 0
        %451 = vmatpush1.bf16.msra.mxu0 0
        %452 = vmatprep.subr.bf16.mxu0 0
        %453 = vmatpush1.bf16.msra.mxu0 0
        %454 = vmatprep.subr.bf16.mxu0 0
        %455 = vmatpush1.bf16.msra.mxu0 0
        %456 = vmatprep.subr.bf16.mxu0 0
        %457 = vmatpush1.bf16.msra.mxu0 0
        %458 = vmatprep.subr.bf16.mxu0 0
        %459 = vmatpush1.bf16.msra.mxu0 0
        %460 = vmatprep.subr.bf16.mxu0 0
        %461 = vmatpush1.bf16.msra.mxu0 0
        %462 = vmatprep.subr.bf16.mxu0 0
        %463 = vmatpush1.bf16.msra.mxu0 0
        %464 = vmatprep.subr.bf16.mxu0 0
        %465 = vmatpush1.bf16.msra.mxu0 0
        %466 = vmatprep.subr.bf16.mxu0 0
        %467 = vmatpush1.bf16.msra.mxu0 0
        %468 = vmatprep.subr.bf16.mxu0 0
        %469 = vmatpush1.bf16.msra.mxu0 0
        %470 = vmatprep.subr.bf16.mxu0 0
        %471 = vmatpush1.bf16.msra.mxu0 0
        %472 = vmatprep.subr.bf16.mxu0 0
        %473 = vmatpush1.bf16.msra.mxu0 0
        %474 = vmatprep.subr.bf16.mxu0 0
        %475 = vmatpush1.bf16.msra.mxu0 0
        %476 = vmatprep.subr.bf16.mxu0 0
        %477 = vmatpush1.bf16.msra.mxu0 0
        %478 = vmatprep.mubr.bf16.mxu0 0
        %479 = vmatmul.mubr.bf16.gmra.mrb[0].mxu0 %v444
        %v480 = vpop.f32.mrb[0].mxu0
        %v481 = vadd.f32 %v428, %v480
        %v482 = vpop.f32.mrb[0].mxu0
        %v483 = vpop.f32.mrb[0].mxu0
        %v484 = vpop.f32.mrb[0].mxu0
        %485 = vdwg.mxu0
        %v486 = vld [vmem:[#allocation7] sm:$0xf]
        %v487 = vld [vmem:[#allocation7 + $0x4] sm:$0xf]
        %v488 = vld [vmem:[#allocation7 + $0x8] sm:$0xf]
        %v489 = vld [vmem:[#allocation7 + $0xc] sm:$0xf]
        %v490 = vld [vmem:[%s4] sm:$0x1]
        %v492 = vlaneseq
        %v493 = vshrl.u32 %v492, 7
        %v494 = vsub.s32 0, %v493
        %v495 = vrot.slane %v490, %v494
        %v501 = vunpack.c.l.b16 %v486
        %v502 = vunpack.c.l.b16 %v487
        %v503 = vunpack.c.l.b16 %v488
        %v504 = vunpack.c.l.b16 %v489
        %v505 = vpack.c.b16 %v502, %v501
        %v506 = vpack.c.b16 %v504, %v503
        %509 = vmatprep.subr.bf16.mxu0 0
        %510 = vmatpush1.bf16.msra.mxu0 %v505
        %511 = vmatprep.subr.bf16.mxu0 0
        %512 = vmatpush1.bf16.msra.mxu0 %v506
        %513 = vmatprep.subr.bf16.mxu0 0
        %514 = vmatpush1.bf16.msra.mxu0 0
        %515 = vmatprep.subr.bf16.mxu0 0
        %516 = vmatpush1.bf16.msra.mxu0 0
        %517 = vmatprep.subr.bf16.mxu0 0
        %518 = vmatpush1.bf16.msra.mxu0 0
        %519 = vmatprep.subr.bf16.mxu0 0
        %520 = vmatpush1.bf16.msra.mxu0 0
        %521 = vmatprep.subr.bf16.mxu0 0
        %522 = vmatpush1.bf16.msra.mxu0 0
        %523 = vmatprep.subr.bf16.mxu0 0
        %524 = vmatpush1.bf16.msra.mxu0 0
        %525 = vmatprep.subr.bf16.mxu0 0
        %526 = vmatpush1.bf16.msra.mxu0 0
        %527 = vmatprep.subr.bf16.mxu0 0
        %528 = vmatpush1.bf16.msra.mxu0 0
        %529 = vmatprep.subr.bf16.mxu0 0
        %530 = vmatpush1.bf16.msra.mxu0 0
        %531 = vmatprep.subr.bf16.mxu0 0
        %532 = vmatpush1.bf16.msra.mxu0 0
        %533 = vmatprep.subr.bf16.mxu0 0
        %534 = vmatpush1.bf16.msra.mxu0 0
        %535 = vmatprep.subr.bf16.mxu0 0
        %536 = vmatpush1.bf16.msra.mxu0 0
        %537 = vmatprep.subr.bf16.mxu0 0
        %538 = vmatpush1.bf16.msra.mxu0 0
        %539 = vmatprep.subr.bf16.mxu0 0
        %540 = vmatpush1.bf16.msra.mxu0 0
        %541 = vmatprep.mubr.bf16.mxu0 0
        %542 = vmatmul.mubr.bf16.gmra.mrb[0].mxu0 %v444
        %v543 = vpop.f32.mrb[0].mxu0
        %v544 = vadd.f32 %v495, %v543
        %v545 = vpop.f32.mrb[0].mxu0
        %v546 = vpop.f32.mrb[0].mxu0
        %v547 = vpop.f32.mrb[0].mxu0
        %548 = vdwg.mxu0
        %v549 = vld [vmem:[%s5] sm:$0xf]
        %v550 = vld [vmem:[%s5 + $0x4] sm:$0xf]
        %v551 = vld [vmem:[%s5 + $0x8] sm:$0xf]
        %v552 = vld [vmem:[%s5 + $0xc] sm:$0xf]
        %v553 = vld [vmem:[%s6] sm:$0x1]
        %v555 = vlaneseq
        %v556 = vshrl.u32 %v555, 7
        %v557 = vsub.s32 0, %v556
        %v558 = vrot.slane %v553, %v557
        %v564 = vunpack.c.l.b16 %v549
        %v565 = vunpack.c.l.b16 %v550
        %v566 = vunpack.c.l.b16 %v551
        %v567 = vunpack.c.l.b16 %v552
        %v568 = vpack.c.b16 %v565, %v564
        %v569 = vpack.c.b16 %v567, %v566
        %572 = vmatprep.subr.bf16.mxu0 0
        %573 = vmatpush1.bf16.msra.mxu0 %v568
        %574 = vmatprep.subr.bf16.mxu0 0
        %575 = vmatpush1.bf16.msra.mxu0 %v569
        %576 = vmatprep.subr.bf16.mxu0 0
        %577 = vmatpush1.bf16.msra.mxu0 0
        %578 = vmatprep.subr.bf16.mxu0 0
        %579 = vmatpush1.bf16.msra.mxu0 0
        %580 = vmatprep.subr.bf16.mxu0 0
        %581 = vmatpush1.bf16.msra.mxu0 0
        %582 = vmatprep.subr.bf16.mxu0 0
        %583 = vmatpush1.bf16.msra.mxu0 0
        %584 = vmatprep.subr.bf16.mxu0 0
        %585 = vmatpush1.bf16.msra.mxu0 0
        %586 = vmatprep.subr.bf16.mxu0 0
        %587 = vmatpush1.bf16.msra.mxu0 0
        %588 = vmatprep.subr.bf16.mxu0 0
        %589 = vmatpush1.bf16.msra.mxu0 0
        %590 = vmatprep.subr.bf16.mxu0 0
        %591 = vmatpush1.bf16.msra.mxu0 0
        %592 = vmatprep.subr.bf16.mxu0 0
        %593 = vmatpush1.bf16.msra.mxu0 0
        %594 = vmatprep.subr.bf16.mxu0 0
        %595 = vmatpush1.bf16.msra.mxu0 0
        %596 = vmatprep.subr.bf16.mxu0 0
        %597 = vmatpush1.bf16.msra.mxu0 0
        %598 = vmatprep.subr.bf16.mxu0 0
        %599 = vmatpush1.bf16.msra.mxu0 0
        %600 = vmatprep.subr.bf16.mxu0 0
        %601 = vmatpush1.bf16.msra.mxu0 0
        %602 = vmatprep.subr.bf16.mxu0 0
        %603 = vmatpush1.bf16.msra.mxu0 0
        %604 = vmatprep.mubr.bf16.mxu0 0
        %605 = vmatmul.mubr.bf16.gmra.mrb[0].mxu0 %v444
        %v606 = vpop.f32.mrb[0].mxu0
        %v607 = vadd.f32 %v558, %v606
        %v608 = vpop.f32.mrb[0].mxu0
        %v609 = vpop.f32.mrb[0].mxu0
        %v610 = vpop.f32.mrb[0].mxu0
        %611 = vdwg.mxu0
        %v612 = vpack.c.bf16 %v481, %v481
        %vm613 = vcmask 60416
        %614 = vst.msk [vmem:[%s401] sm:$0xf] %vm613, %v612
        %v615 = vpack.c.bf16 %v544, %v544
        %616 = vst.msk [vmem:[%s408] sm:$0xf] %vm613, %v615
        %v617 = vpack.c.bf16 %v607, %v607
        %618 = vst.msk [vmem:[%s415] sm:$0xf] %vm613, %v617
        %v620 = vunpack.c.l.b16 %v612
        %v621 = vpack.c.b16 %v620, %v620
        %622 = vrot.lane.b32.xlu0 %v621, 120
        %v623 = vpop.permute.xlu0 %622
        %s625 = scalar_lea.vmem %s401, 4 [#allocation8]
        %626 = vst.msk [vmem:[%s625] sm:$0xf] %vm613, %v623
        %v628 = vunpack.c.l.b16 %v615
        %v629 = vpack.c.b16 %v628, %v628
        %630 = vrot.lane.b32.xlu0 %v629, 120
        %v631 = vpop.permute.xlu0 %630
        %s633 = scalar_lea.vmem %s408, 4 [#allocation9]
        %634 = vst.msk [vmem:[%s633] sm:$0xf] %vm613, %v631
        %v636 = vunpack.c.l.b16 %v617
        %v637 = vpack.c.b16 %v636, %v636
        %638 = vrot.lane.b32.xlu0 %v637, 120
        %v639 = vpop.permute.xlu0 %638
        %s641 = scalar_lea.vmem %s415, 4 [#allocation11]
        %642 = vst.msk [vmem:[%s641] sm:$0xf] %vm613, %v639
        %643 = vrot.lane.b32.xlu0 %v621, 112
        %v644 = vpop.permute.xlu0 %643
        %s646 = scalar_lea.vmem %s401, 8 [#allocation8]
        %647 = vst.msk [vmem:[%s646] sm:$0xf] %vm613, %v644
        %648 = vrot.lane.b32.xlu0 %v629, 112
        %v649 = vpop.permute.xlu0 %648
        %s651 = scalar_lea.vmem %s408, 8 [#allocation9]
        %652 = vst.msk [vmem:[%s651] sm:$0xf] %vm613, %v649
        %653 = vrot.lane.b32.xlu0 %v637, 112
        %v654 = vpop.permute.xlu0 %653
        %s656 = scalar_lea.vmem %s415, 8 [#allocation11]
        %657 = vst.msk [vmem:[%s656] sm:$0xf] %vm613, %v654
        %658 = vrot.lane.b32.xlu0 %v621, 104
        %v659 = vpop.permute.xlu0 %658
        %s661 = scalar_lea.vmem %s401, 12 [#allocation8]
        %662 = vst.msk [vmem:[%s661] sm:$0xf] %vm613, %v659
        %663 = vrot.lane.b32.xlu0 %v629, 104
        %v664 = vpop.permute.xlu0 %663
        %s666 = scalar_lea.vmem %s408, 12 [#allocation9]
        %667 = vst.msk [vmem:[%s666] sm:$0xf] %vm613, %v664
        %668 = vrot.lane.b32.xlu0 %v637, 104
        %v669 = vpop.permute.xlu0 %668
        %s671 = scalar_lea.vmem %s415, 12 [#allocation11]
        %672 = vst.msk [vmem:[%s671] sm:$0xf] %vm613, %v669
        %s673 = sand.u32 %s207, 1
        %s674 = scalar_lea.sflag [#allocation4], %s673
        %s675 = sand.u32 %s207, 1
        %s676 = smul.addr %s675, 16
        %s677 = scalar_lea.vmem [#allocation8], %s676
        %s678 = sand.u32 %s31, 1
        %s679 = scalar_lea.sflag [#allocation10], %s678
        %s680 = sand.u32 %s235, 1
        %s681 = smul.addr %s680, 16
        %s682 = scalar_lea.vmem [#allocation9], %s681
        %s683 = sand.u32 %s31, 1
        %s684 = scalar_lea.sflag [#allocation10], %s683
        %s685 = sand.u32 %s263, 1
        %s686 = smul.addr %s685, 16
        %s687 = scalar_lea.vmem [#allocation11], %s686
        // Predicated region
        $region61: #{tpu_custom_call.1} parent=47 // pred_check
          %p688 = pneg %p217
        $region62: #{tpu_custom_call.1} parent=47 // pred_check_branch
          %690 = sbr.rel (%p688) target = $region64
        $region63: #{tpu_custom_call.1} parent=47 // pred_region
          %s692 = ssub.s32 256, 256
          %693 = vsyncadd %s674, %s692
          %s694 = smul.addr %s35, 4
          %s695 = sadd.s32 %s36, %s694
          %s696 = smul.addr %s695, 64
          %s697 = scalar_lea.hbm %s7, %s696
          %s698 = sshll.u32 %s677, 4
          %s699 = int_to_ptr.vmem [resolvable:$true] %s698
          %704 = dma.vmem_to_hbm [thread:$0]  %s699, 256, %s697, %s674, 64, 64, 4
        $region64: #{tpu_custom_call.1} parent=47 // pred_fallthru
          _
        // Predicated region
        $region65: #{tpu_custom_call.1} parent=47 // pred_check
          %p705 = pneg %p245
        $region66: #{tpu_custom_call.1} parent=47 // pred_check_branch
          %707 = sbr.rel (%p705) target = $region68
        $region67: #{tpu_custom_call.1} parent=47 // pred_region
          %s709 = ssub.s32 256, 256
          %710 = vsyncadd %s679, %s709
          %s711 = smul.addr %s35, 4
          %s712 = sadd.s32 %s36, %s711
          %s713 = smul.addr %s712, 64
          %s714 = scalar_lea.hbm %s8, %s713
          %s715 = sshll.u32 %s682, 4
          %s716 = int_to_ptr.vmem [resolvable:$true] %s715
          %721 = dma.vmem_to_hbm [thread:$0]  %s716, 256, %s714, %s679, 64, 64, 4
        $region68: #{tpu_custom_call.1} parent=47 // pred_fallthru
          _
        // Predicated region
        $region69: #{tpu_custom_call.1} parent=47 // pred_check
          %p722 = pneg %p273
        $region70: #{tpu_custom_call.1} parent=47 // pred_check_branch
          %724 = sbr.rel (%p722) target = $region72
        $region71: #{tpu_custom_call.1} parent=47 // pred_region
          %s726 = ssub.s32 256, 256
          %727 = vsyncadd %s684, %s726
          %s728 = smul.addr %s35, 4
          %s729 = sadd.s32 %s36, %s728
          %s730 = smul.addr %s729, 64
          %s731 = scalar_lea.hbm %s9, %s730
          %s732 = sshll.u32 %s687, 4
          %s733 = int_to_ptr.vmem [resolvable:$true] %s732
          %738 = dma.vmem_to_hbm [thread:$0]  %s733, 256, %s731, %s684, 64, 64, 4
        $region72: #{tpu_custom_call.1} parent=47 // pred_fallthru
          _
      $region48: #{tpu_custom_call.1} parent=5 // pred_fallthru
        _
      %p739 = scmp.le.s32.totalorder 2, %s26
      // Predicated region
      $region73: #{tpu_custom_call.1} parent=5 // pred_check
        %p740 = pneg %p739
      $region74: #{tpu_custom_call.1} parent=5 // pred_check_branch
        %742 = sbr.rel (%p740) target = $region76
      $region75: #{tpu_custom_call.1} parent=5 // pred_region
        %s743 = ssub.s32 %s26, 2
        // Predicated region
        $region77: #{tpu_custom_call.1} parent=75 // pred_check
          %p744 = pneg %p223
        $region78: #{tpu_custom_call.1} parent=75 // pred_check_branch
          %746 = sbr.rel (%p744) target = $region80
        $region79: #{tpu_custom_call.1} parent=75 // pred_region
          %s747 = sand.u32 %s208, 1
          %s748 = scalar_lea.sflag [#allocation4], %s747
          %s749 = sand.u32 %s208, 1
          %s750 = smul.addr %s749, 16
          %s751 = scalar_lea.vmem [#allocation8], %s750
          %752 = dma.done %s748, 256
        $region80: #{tpu_custom_call.1} parent=75 // pred_fallthru
          _
        // Predicated region
        $region81: #{tpu_custom_call.1} parent=75 // pred_check
          %p753 = pneg %p251
        $region82: #{tpu_custom_call.1} parent=75 // pred_check_branch
          %755 = sbr.rel (%p753) target = $region84
        $region83: #{tpu_custom_call.1} parent=75 // pred_region
          %s756 = sand.u32 %s32, 1
          %s757 = scalar_lea.sflag [#allocation10], %s756
          %s758 = sand.u32 %s236, 1
          %s759 = smul.addr %s758, 16
          %s760 = scalar_lea.vmem [#allocation9], %s759
          %761 = dma.done %s757, 256
        $region84: #{tpu_custom_call.1} parent=75 // pred_fallthru
          _
        // Predicated region
        $region85: #{tpu_custom_call.1} parent=75 // pred_check
          %p762 = pneg %p279
        $region86: #{tpu_custom_call.1} parent=75 // pred_check_branch
          %764 = sbr.rel (%p762) target = $region88
        $region87: #{tpu_custom_call.1} parent=75 // pred_region
          %s765 = sand.u32 %s32, 1
          %s766 = scalar_lea.sflag [#allocation10], %s765
          %s767 = sand.u32 %s264, 1
          %s768 = smul.addr %s767, 16
          %s769 = scalar_lea.vmem [#allocation11], %s768
          %770 = dma.done %s766, 256
        $region88: #{tpu_custom_call.1} parent=75 // pred_fallthru
          _
      $region76: #{tpu_custom_call.1} parent=5 // pred_fallthru
        _
    $region6: #{tpu_custom_call.1} parent=1 // loop_footer
      %s30 = sadd.s32 1, %s26
    $region7: #{tpu_custom_call.1} parent=1 // loop_footer_branch
      %25 = sbr.rel target = $region3
    $region8: #{tpu_custom_call.1} parent=1 // loop_exit
      _
    %771 = vsyncpa [#allocation3], 1
    %s772 = scalar_lea.sflag [#allocation3], 1
    %773 = vsyncpa %s772, 1
    %774 = vsyncpa [#allocation6], 1
    %775 = vsyncpa [#allocation4], 1
    %s776 = scalar_lea.sflag [#allocation4], 1
    %777 = vsyncpa %s776, 1
    %778 = vsyncpa [#allocation10], 1
    %s779 = scalar_lea.sflag [#allocation10], 1
    %780 = vsyncpa %s779, 1

</llo_original>
